<compile_context>
chip_gen: v5e
topology: v5e:2x2
jax: 0.10.0
libtpu: 0.0.40
codegen_flags: <defaults>
</compile_context>

<pallas_src>
import math

import jax
import jax.numpy as jnp
from jax.experimental import pallas as pl
from jax.experimental.pallas import tpu as pltpu


def _round_up(x: int, m: int) -> int:
    return ((x + m - 1) // m) * m


# ---------------------------------------------------------------------------
# Kernel
# ---------------------------------------------------------------------------
def actor_kernel(x_ref, w1_ref, b1_ref, w2_ref, b2_ref, w3_ref, b3_ref, o_ref):
    # fc1 + relu  (bf16 x bf16 -> f32 accumulate on the MXU)
    h = jnp.dot(x_ref[...], w1_ref[...], preferred_element_type=jnp.float32)
    h = jnp.maximum(h + b1_ref[...], 0.0)
    # dropout (eval mode) -> identity
    # fc2 + relu
    h = jnp.dot(h.astype(jnp.bfloat16), w2_ref[...],
                preferred_element_type=jnp.float32)
    h = jnp.maximum(h + b2_ref[...], 0.0)
    # dropout (eval mode) -> identity
    # fc3 + tanh (lane-dense padded output slab; padded cols are tanh(0)=0)
    h = jnp.dot(h.astype(jnp.bfloat16), w3_ref[...],
                preferred_element_type=jnp.float32)
    o_ref[...] = jnp.tanh(h + b3_ref[...]).astype(o_ref.dtype)


# ---------------------------------------------------------------------------
# Wrapper
# ---------------------------------------------------------------------------
def actor_forward(state, params, *, block_b=256):
    """Runs the fused Actor forward. `state` is [B, input_dim] float32."""
    w1, b1 = params["w1"], params["b1"]
    w2, b2 = params["w2"], params["b2"]
    w3, b3 = params["w3"], params["b3"]
    out_dim = params["output_dim"]

    B, d_in = state.shape
    d_in_p, h_p = w1.shape
    d_out_p = w3.shape[1]

    # Batch tile: multiple of 8 sublanes, capped by block_b.
    tb = min(block_b, _round_up(max(B, 1), 8))
    b_p = _round_up(B, tb)

    # Pad state to (b_p, d_in_p) in bf16 (zero rows/cols are inert).
    x = state.astype(jnp.bfloat16)
    x = jnp.pad(x, ((0, b_p - B), (0, d_in_p - d_in)))

    grid = (b_p // tb,)

    flops = 2 * b_p * (d_in_p * h_p + h_p * h_p + h_p * d_out_p)
    bytes_accessed = (
        b_p * d_in_p * 2                        # state (bf16)
        + (d_in_p * h_p + h_p * h_p + h_p * d_out_p) * 2   # weights (bf16)
        + (2 * h_p + d_out_p) * 4               # biases (f32)
        + b_p * d_out_p * 4                     # output (f32)
    )
    cost = pl.CostEstimate(
        flops=flops,
        transcendentals=b_p * d_out_p,          # tanh
        bytes_accessed=bytes_accessed,
    )

    out = pl.pallas_call(
        actor_kernel,
        out_shape=jax.ShapeDtypeStruct((b_p, d_out_p), jnp.float32),
        grid=grid,
        in_specs=[
            pl.BlockSpec((tb, d_in_p), lambda i: (i, 0)),      # state tile
            pl.BlockSpec((d_in_p, h_p), lambda i: (0, 0)),     # w1 (resident)
            pl.BlockSpec((1, h_p), lambda i: (0, 0)),          # b1 (resident)
            pl.BlockSpec((h_p, h_p), lambda i: (0, 0)),        # w2 (resident)
            pl.BlockSpec((1, h_p), lambda i: (0, 0)),          # b2 (resident)
            pl.BlockSpec((h_p, d_out_p), lambda i: (0, 0)),    # w3 (resident)
            pl.BlockSpec((1, d_out_p), lambda i: (0, 0)),      # b3 (resident)
        ],
        out_specs=pl.BlockSpec((tb, d_out_p), lambda i: (i, 0)),
        compiler_params=pltpu.CompilerParams(
            dimension_semantics=("parallel",),
        ),
        cost_estimate=cost,
    )(x, w1, b1, w2, b2, w3, b3)

    # Strip batch padding and the zero-padded output lanes.
    return out[:B, :out_dim]


# ---------------------------------------------------------------------------
# Params (Xavier-uniform weights, zero biases), padded + bf16
# ---------------------------------------------------------------------------
def init_actor_params(key, input_dim, hidden_dim, output_dim):
    """Matches nn.init.xavier_uniform_ / zeros_, stored (in, out)-transposed,
    zero-padded to multiples of 128 on every feature dim, weights in bf16."""
    d_in_p = _round_up(input_dim, 128)
    h_p = _round_up(hidden_dim, 128)
    d_out_p = _round_up(output_dim, 128)

    def xavier(k, fan_in, fan_out, pad_in, pad_out):
        bound = math.sqrt(6.0 / (fan_in + fan_out))
        w = jax.random.uniform(k, (fan_in, fan_out), jnp.float32,
                               minval=-bound, maxval=bound)
        w = jnp.pad(w, ((0, pad_in - fan_in), (0, pad_out - fan_out)))
        return w.astype(jnp.bfloat16)

    k1, k2, k3 = jax.random.split(key, 3)
    return {
        "w1": xavier(k1, input_dim, hidden_dim, d_in_p, h_p),
        "b1": jnp.zeros((1, h_p), jnp.float32),
        "w2": xavier(k2, hidden_dim, hidden_dim, h_p, h_p),
        "b2": jnp.zeros((1, h_p), jnp.float32),
        "w3": xavier(k3, hidden_dim, output_dim, h_p, d_out_p),
        "b3": jnp.zeros((1, d_out_p), jnp.float32),
        "input_dim": input_dim,
        "hidden_dim": hidden_dim,
        "output_dim": output_dim,
    }


# ---------------------------------------------------------------------------
# Pure-JAX reference (same bf16-in / f32-accumulate numerics, eval dropout)
# ---------------------------------------------------------------------------
def actor_reference(state, params):
    w1, b1 = params["w1"], params["b1"]
    w2, b2 = params["w2"], params["b2"]
    w3, b3 = params["w3"], params["b3"]
    out_dim = params["output_dim"]

    d_in = state.shape[1]
    x = jnp.pad(state.astype(jnp.bfloat16), ((0, 0), (0, w1.shape[0] - d_in)))
    h = jnp.dot(x, w1, preferred_element_type=jnp.float32)
    h = jnp.maximum(h + b1, 0.0)
    h = jnp.dot(h.astype(jnp.bfloat16), w2, preferred_element_type=jnp.float32)
    h = jnp.maximum(h + b2, 0.0)
    h = jnp.dot(h.astype(jnp.bfloat16), w3, preferred_element_type=jnp.float32)
    return jnp.tanh(h + b3)[:, :out_dim]


if __name__ == "__main__":
    # CartPole-like dims: 4-dim observation, 32 hidden, 1-dim continuous action.
    input_dim, hidden_dim, output_dim = 4, 32, 1

    key = jax.random.PRNGKey(0)
    k_params, k_state1, k_state2 = jax.random.split(key, 3)
    params = init_actor_params(k_params, input_dim, hidden_dim, output_dim)

    # Case 1: a batch of environment states, small block to exercise the
    # multi-step pipelined grid (grid=(2,)).
    state = jax.random.normal(k_state1, (64, input_dim), jnp.float32)
    out = jax.block_until_ready(actor_forward(state, params, block_b=32))
    ref = actor_reference(state, params)
    assert out.shape == (64, output_dim)
    assert jnp.allclose(out, ref, atol=1e-3, rtol=1e-3), (out, ref)

    # Case 2: ragged tiny batch (B=2) -> padded up to one 8-row tile.
    state2 = jax.random.normal(k_state2, (2, input_dim), jnp.float32)
    out2 = jax.block_until_ready(actor_forward(state2, params))
    ref2 = actor_reference(state2, params)
    assert out2.shape == (2, output_dim)
    assert jnp.allclose(out2, ref2, atol=1e-3, rtol=1e-3), (out2, ref2)

    print("KERNEL_OK")
</pallas_src>

<mosaic_0001>
module attributes {stable_mosaic.version = 11 : i64} {
  func.func @actor_kernel(%arg0: i32, %arg1: memref<32x128xbf16, #tpu.memory_space<vmem>>, %arg2: memref<128x128xbf16, #tpu.memory_space<vmem>>, %arg3: memref<1x128xf32, #tpu.memory_space<vmem>>, %arg4: memref<128x128xbf16, #tpu.memory_space<vmem>>, %arg5: memref<1x128xf32, #tpu.memory_space<vmem>>, %arg6: memref<128x128xbf16, #tpu.memory_space<vmem>>, %arg7: memref<1x128xf32, #tpu.memory_space<vmem>>, %arg8: memref<32x128xf32, #tpu.memory_space<vmem>>) attributes {dimension_semantics = [#tpu.dimension_semantics<parallel>], iteration_bounds = array<i64: 2>, scalar_prefetch = 0 : i64, scratch_operands = 0 : i64, tpu.core_type = #tpu.core_type<tc>, window_params = [{transform_indices = @transform_0, window_bounds = array<i64: 32, 128>}, {pipeline_mode = #tpu.pipeline_mode<synchronous>, transform_indices = @transform_1, window_bounds = array<i64: 128, 128>}, {pipeline_mode = #tpu.pipeline_mode<synchronous>, transform_indices = @transform_2, window_bounds = array<i64: 1, 128>}, {pipeline_mode = #tpu.pipeline_mode<synchronous>, transform_indices = @transform_3, window_bounds = array<i64: 128, 128>}, {pipeline_mode = #tpu.pipeline_mode<synchronous>, transform_indices = @transform_4, window_bounds = array<i64: 1, 128>}, {pipeline_mode = #tpu.pipeline_mode<synchronous>, transform_indices = @transform_5, window_bounds = array<i64: 128, 128>}, {pipeline_mode = #tpu.pipeline_mode<synchronous>, transform_indices = @transform_6, window_bounds = array<i64: 1, 128>}, {transform_indices = @transform_7, window_bounds = array<i64: 32, 128>}]} {
    %c0 = arith.constant 0 : index
    %c0_0 = arith.constant 0 : index
    %0 = vector.load %arg1[%c0, %c0_0] : memref<32x128xbf16, #tpu.memory_space<vmem>>, vector<32x128xbf16>
    %c0_1 = arith.constant 0 : index
    %c0_2 = arith.constant 0 : index
    %1 = vector.load %arg2[%c0_1, %c0_2] : memref<128x128xbf16, #tpu.memory_space<vmem>>, vector<128x128xbf16>
    %cst = arith.constant dense<0.000000e+00> : vector<32x128xf32>
    %2 = tpu.matmul %0, %1, %cst {dimension_numbers = #tpu.dot_dimension_numbers<[1], [0], [0], [1], [0, 0, 1, 1], [], []>} : vector<32x128xbf16>, vector<128x128xbf16>, vector<32x128xf32> -> vector<32x128xf32>
    %c0_3 = arith.constant 0 : index
    %c0_4 = arith.constant 0 : index
    %3 = vector.load %arg3[%c0_3, %c0_4] : memref<1x128xf32, #tpu.memory_space<vmem>>, vector<1x128xf32>
    %4 = vector.broadcast %3 : vector<1x128xf32> to vector<32x128xf32>
    %5 = arith.addf %2, %4 : vector<32x128xf32>
    %cst_5 = arith.constant 0.000000e+00 : f32
    %6 = vector.broadcast %cst_5 : f32 to vector<32x128xf32>
    %7 = arith.maximumf %5, %6 : vector<32x128xf32>
    %8 = arith.truncf %7 : vector<32x128xf32> to vector<32x128xbf16>
    %c0_6 = arith.constant 0 : index
    %c0_7 = arith.constant 0 : index
    %9 = vector.load %arg4[%c0_6, %c0_7] : memref<128x128xbf16, #tpu.memory_space<vmem>>, vector<128x128xbf16>
    %cst_8 = arith.constant dense<0.000000e+00> : vector<32x128xf32>
    %10 = tpu.matmul %8, %9, %cst_8 {dimension_numbers = #tpu.dot_dimension_numbers<[1], [0], [0], [1], [0, 0, 1, 1], [], []>} : vector<32x128xbf16>, vector<128x128xbf16>, vector<32x128xf32> -> vector<32x128xf32>
    %c0_9 = arith.constant 0 : index
    %c0_10 = arith.constant 0 : index
    %11 = vector.load %arg5[%c0_9, %c0_10] : memref<1x128xf32, #tpu.memory_space<vmem>>, vector<1x128xf32>
    %12 = vector.broadcast %11 : vector<1x128xf32> to vector<32x128xf32>
    %13 = arith.addf %10, %12 : vector<32x128xf32>
    %cst_11 = arith.constant 0.000000e+00 : f32
    %14 = vector.broadcast %cst_11 : f32 to vector<32x128xf32>
    %15 = arith.maximumf %13, %14 : vector<32x128xf32>
    %16 = arith.truncf %15 : vector<32x128xf32> to vector<32x128xbf16>
    %c0_12 = arith.constant 0 : index
    %c0_13 = arith.constant 0 : index
    %17 = vector.load %arg6[%c0_12, %c0_13] : memref<128x128xbf16, #tpu.memory_space<vmem>>, vector<128x128xbf16>
    %cst_14 = arith.constant dense<0.000000e+00> : vector<32x128xf32>
    %18 = tpu.matmul %16, %17, %cst_14 {dimension_numbers = #tpu.dot_dimension_numbers<[1], [0], [0], [1], [0, 0, 1, 1], [], []>} : vector<32x128xbf16>, vector<128x128xbf16>, vector<32x128xf32> -> vector<32x128xf32>
    %c0_15 = arith.constant 0 : index
    %c0_16 = arith.constant 0 : index
    %19 = vector.load %arg7[%c0_15, %c0_16] : memref<1x128xf32, #tpu.memory_space<vmem>>, vector<1x128xf32>
    %20 = vector.broadcast %19 : vector<1x128xf32> to vector<32x128xf32>
    %21 = arith.addf %18, %20 : vector<32x128xf32>
    %22 = math.tanh %21 : vector<32x128xf32>
    %c0_17 = arith.constant 0 : index
    %c0_18 = arith.constant 0 : index
    %23 = vector.load %arg8[%c0_17, %c0_18] : memref<32x128xf32, #tpu.memory_space<vmem>>, vector<32x128xf32>
    tpu.vector_store %arg8[%c0_17, %c0_18], %22 {strides = array<i32>} : memref<32x128xf32, #tpu.memory_space<vmem>>, vector<32x128xf32>,
    return
  }
  func.func @transform_0(%arg0: i32) -> (i32, i32) {
    %c0_i32 = arith.constant 0 : i32
    %c0_i32_0 = arith.constant 0 : i32
    return %arg0, %c0_i32 : i32, i32
  }
  func.func @transform_1(%arg0: i32) -> (i32, i32) {
    %c0_i32 = arith.constant 0 : i32
    %c0_i32_0 = arith.constant 0 : i32
    %c0_i32_1 = arith.constant 0 : i32
    return %c0_i32, %c0_i32_0 : i32, i32
  }
  func.func @transform_2(%arg0: i32) -> (i32, i32) {
    %c0_i32 = arith.constant 0 : i32
    %c0_i32_0 = arith.constant 0 : i32
    %c0_i32_1 = arith.constant 0 : i32
    return %c0_i32, %c0_i32_0 : i32, i32
  }
  func.func @transform_3(%arg0: i32) -> (i32, i32) {
    %c0_i32 = arith.constant 0 : i32
    %c0_i32_0 = arith.constant 0 : i32
    %c0_i32_1 = arith.constant 0 : i32
    return %c0_i32, %c0_i32_0 : i32, i32
  }
  func.func @transform_4(%arg0: i32) -> (i32, i32) {
    %c0_i32 = arith.constant 0 : i32
    %c0_i32_0 = arith.constant 0 : i32
    %c0_i32_1 = arith.constant 0 : i32
    return %c0_i32, %c0_i32_0 : i32, i32
  }
  func.func @transform_5(%arg0: i32) -> (i32, i32) {
    %c0_i32 = arith.constant 0 : i32
    %c0_i32_0 = arith.constant 0 : i32
    %c0_i32_1 = arith.constant 0 : i32
    return %c0_i32, %c0_i32_0 : i32, i32
  }
  func.func @transform_6(%arg0: i32) -> (i32, i32) {
    %c0_i32 = arith.constant 0 : i32
    %c0_i32_0 = arith.constant 0 : i32
    %c0_i32_1 = arith.constant 0 : i32
    return %c0_i32, %c0_i32_0 : i32, i32
  }
  func.func @transform_7(%arg0: i32) -> (i32, i32) {
    %c0_i32 = arith.constant 0 : i32
    %c0_i32_0 = arith.constant 0 : i32
    return %arg0, %c0_i32 : i32, i32
  }
}

</mosaic_0001>

<llo_original>
// kernel: tpu_custom_call.1
$region0: #{tpu_custom_call.1}
  #allocation0 [shape = 'u32[]', space=smem, size = 0x4, offset = 0x4, fixed_abs, tag = 'smem constant byte address 0x4 - core index']
  #allocation1 [shape = 'u32[72,128]{1,0:T(1,128)}', space=vmem, size = 0x9000, scoped, tag = 'internal scratch']
  %s0 = inlined_call_operand.hbm [shape: bf16[64,128], index: 0, kind: input, shape index: {}]
  %s1 = inlined_call_operand.hbm [shape: bf16[128,128], index: 1, kind: input, shape index: {}]
  %s2 = inlined_call_operand.vmem [shape: f32[1,128], index: 2, kind: input, shape index: {}]
  %s3 = inlined_call_operand.hbm [shape: bf16[128,128], index: 3, kind: input, shape index: {}]
  %s4 = inlined_call_operand.vmem [shape: f32[1,128], index: 4, kind: input, shape index: {}]
  %s5 = inlined_call_operand.hbm [shape: bf16[128,128], index: 5, kind: input, shape index: {}]
  %s6 = inlined_call_operand.vmem [shape: f32[1,128], index: 6, kind: input, shape index: {}]
  %s7 = inlined_call_operand.hbm [shape: f32[64,128], index: 7, kind: output, shape index: {}]
  %s8 = sld [smem:[#allocation0]]
  $region77: #{tpu_custom_call.1} parent=0
    _
  %s10 = ssub.s32 1, %s8
  %s11 = scalar_select 0, %s10, %s8
  $region1: #{tpu_custom_call.1} parent=0
    #allocation2 [shape = 'u8[16384]{0}', space=vmem, size = 0x4000, scoped, tag = 'input window, operand 0']
    #allocation3 [shape = 's32[2]{0}', space=sflag, size = 0x8, scoped, tag = 'scoped memory for tpu_custom_call.1']
    #allocation4 [shape = 's32[2]{0}', space=sflag, size = 0x8, scoped, tag = 'scoped memory for tpu_custom_call.1']
    #allocation5 [shape = 'u8[32768]{0}', space=vmem, size = 0x8000, scoped, tag = 'input window, operand 1, single buffered']
    #allocation6 [shape = 's32[1]{0}', space=sflag, size = 0x4, scoped, tag = 'scoped memory for tpu_custom_call.1']
    #allocation7 [shape = 'u8[32768]{0}', space=vmem, size = 0x8000, scoped, tag = 'input window, operand 3, single buffered']
    #allocation8 [shape = 'u8[32768]{0}', space=vmem, size = 0x8000, scoped, tag = 'input window, operand 5, single buffered']
    #allocation9 [shape = 's32[1]{0}', space=sflag, size = 0x4, scoped, tag = 'scoped memory for tpu_custom_call.1']
    #allocation10 [shape = 'u8[32768]{0}', space=vmem, size = 0x8000, scoped, tag = 'output window, operand 0']
    %12 = vsyncpa [#allocation3], 0
    %s13 = scalar_lea.sflag [#allocation3], 1
    %14 = vsyncpa %s13, 0
    %15 = vsyncpa [#allocation6], 0
    %16 = vsyncpa [#allocation9], 0
    %17 = vsyncpa [#allocation4], 0
    %s18 = scalar_lea.sflag [#allocation4], 1
    %19 = vsyncpa %s18, 0
    loop: start=0, step=1, limit=4
    $region2: #{tpu_custom_call.1} parent=1 // loop_pre_header
      _
    $region3: #{tpu_custom_call.1} parent=1 // loop_header
      %s21 = sphi 0, %s25
      %p22 = scmp.ge.s32.totalorder %s21, 4
      %s31 = sphi 0, %s33
      %s34 = sphi 0, %s31
      %s35 = sphi 0, %s34
      %s51 = sphi 0, %s35
      %s55 = sphi 0, %s55
      %s57 = sphi 0, %s55
      %s58 = sphi 0, %s57
      %s72 = sphi 0, %s58
      %s76 = sphi 0, %s76
      %s78 = sphi 0, %s76
      %s79 = sphi 0, %s78
      %s93 = sphi 0, %s79
      %s97 = sphi 0, %s97
      %s99 = sphi 0, %s97
      %s100 = sphi 0, %s99
      %s114 = sphi 0, %s100
      %s118 = sphi 0, %s118
      %s120 = sphi 0, %s118
      %s121 = sphi 0, %s120
      %s135 = sphi 0, %s121
      %s139 = sphi 0, %s139
      %s141 = sphi 0, %s139
      %s142 = sphi 0, %s141
      %s156 = sphi 0, %s142
      %s160 = sphi 0, %s160
      %s162 = sphi 0, %s160
      %s163 = sphi 0, %s162
      %s177 = sphi 0, %s163
      %s183 = sphi 0, %s185
      %s186 = sphi 0, %s183
      %s187 = sphi 0, %s186
      %s203 = sphi 0, %s187
    $region4: #{tpu_custom_call.1} parent=1 // loop_header_branch
      %24 = sbr.rel (%p22) target = $region8
    $region5: #{tpu_custom_call.1} parent=1 // loop_body
      %s26 = ssub.s32 %s21, 1
      %s27 = ssub.s32 %s21, 2
      %s28 = sadd.s32 %s21, 1
      %s29 = ssub.s32 %s21, %s28
      %p30 = scmp.eq.s32.totalorder %s29, 0
      %s32 = sadd.s32 %s31, 1
      %s33 = scalar_select %p30, %s31, %s32
      %p36 = pneg %p30
      %p37 = scmp.eq.s32.totalorder %s21, 1
      %p38 = por %p36, %p37
      %p39 = scmp.ne.s32.totalorder %s31, %s34
      %p40 = scmp.eq.s32.totalorder %s21, 0
      %p41 = por %p39, %p40
      %p42 = scmp.ne.s32.totalorder %s31, %s34
      %p43 = scmp.eq.s32.totalorder %s26, 1
      %p44 = por %p42, %p43
      %p45 = scmp.ne.s32.totalorder %s34, %s35
      %p46 = scmp.eq.s32.totalorder %s26, 0
      %p47 = por %p45, %p46
      %p48 = scmp.ne.s32.totalorder %s34, %s35
      %p49 = scmp.eq.s32.totalorder %s27, 1
      %p50 = por %p48, %p49
      %p52 = scmp.ne.s32.totalorder %s35, %s51
      %p53 = scmp.eq.s32.totalorder %s27, 0
      %p54 = por %p52, %p53
      %s56 = sadd.s32 %s55, 1
      %p59 = scmp.eq.s32.totalorder %s21, 1
      %p60 = scmp.ne.s32.totalorder %s55, %s57
      %p61 = scmp.eq.s32.totalorder %s21, 0
      %p62 = por %p60, %p61
      %p63 = scmp.ne.s32.totalorder %s55, %s57
      %p64 = scmp.eq.s32.totalorder %s26, 1
      %p65 = por %p63, %p64
      %p66 = scmp.ne.s32.totalorder %s57, %s58
      %p67 = scmp.eq.s32.totalorder %s26, 0
      %p68 = por %p66, %p67
      %p69 = scmp.ne.s32.totalorder %s57, %s58
      %p70 = scmp.eq.s32.totalorder %s27, 1
      %p71 = por %p69, %p70
      %p73 = scmp.ne.s32.totalorder %s58, %s72
      %p74 = scmp.eq.s32.totalorder %s27, 0
      %p75 = por %p73, %p74
      %s77 = sadd.s32 %s76, 1
      %p80 = scmp.eq.s32.totalorder %s21, 1
      %p81 = scmp.ne.s32.totalorder %s76, %s78
      %p82 = scmp.eq.s32.totalorder %s21, 0
      %p83 = por %p81, %p82
      %p84 = scmp.ne.s32.totalorder %s76, %s78
      %p85 = scmp.eq.s32.totalorder %s26, 1
      %p86 = por %p84, %p85
      %p87 = scmp.ne.s32.totalorder %s78, %s79
      %p88 = scmp.eq.s32.totalorder %s26, 0
      %p89 = por %p87, %p88
      %p90 = scmp.ne.s32.totalorder %s78, %s79
      %p91 = scmp.eq.s32.totalorder %s27, 1
      %p92 = por %p90, %p91
      %p94 = scmp.ne.s32.totalorder %s79, %s93
      %p95 = scmp.eq.s32.totalorder %s27, 0
      %p96 = por %p94, %p95
      %s98 = sadd.s32 %s97, 1
      %p101 = scmp.eq.s32.totalorder %s21, 1
      %p102 = scmp.ne.s32.totalorder %s97, %s99
      %p103 = scmp.eq.s32.totalorder %s21, 0
      %p104 = por %p102, %p103
      %p105 = scmp.ne.s32.totalorder %s97, %s99
      %p106 = scmp.eq.s32.totalorder %s26, 1
      %p107 = por %p105, %p106
      %p108 = scmp.ne.s32.totalorder %s99, %s100
      %p109 = scmp.eq.s32.totalorder %s26, 0
      %p110 = por %p108, %p109
      %p111 = scmp.ne.s32.totalorder %s99, %s100
      %p112 = scmp.eq.s32.totalorder %s27, 1
      %p113 = por %p111, %p112
      %p115 = scmp.ne.s32.totalorder %s100, %s114
      %p116 = scmp.eq.s32.totalorder %s27, 0
      %p117 = por %p115, %p116
      %s119 = sadd.s32 %s118, 1
      %p122 = scmp.eq.s32.totalorder %s21, 1
      %p123 = scmp.ne.s32.totalorder %s118, %s120
      %p124 = scmp.eq.s32.totalorder %s21, 0
      %p125 = por %p123, %p124
      %p126 = scmp.ne.s32.totalorder %s118, %s120
      %p127 = scmp.eq.s32.totalorder %s26, 1
      %p128 = por %p126, %p127
      %p129 = scmp.ne.s32.totalorder %s120, %s121
      %p130 = scmp.eq.s32.totalorder %s26, 0
      %p131 = por %p129, %p130
      %p132 = scmp.ne.s32.totalorder %s120, %s121
      %p133 = scmp.eq.s32.totalorder %s27, 1
      %p134 = por %p132, %p133
      %p136 = scmp.ne.s32.totalorder %s121, %s135
      %p137 = scmp.eq.s32.totalorder %s27, 0
      %p138 = por %p136, %p137
      %s140 = sadd.s32 %s139, 1
      %p143 = scmp.eq.s32.totalorder %s21, 1
      %p144 = scmp.ne.s32.totalorder %s139, %s141
      %p145 = scmp.eq.s32.totalorder %s21, 0
      %p146 = por %p144, %p145
      %p147 = scmp.ne.s32.totalorder %s139, %s141
      %p148 = scmp.eq.s32.totalorder %s26, 1
      %p149 = por %p147, %p148
      %p150 = scmp.ne.s32.totalorder %s141, %s142
      %p151 = scmp.eq.s32.totalorder %s26, 0
      %p152 = por %p150, %p151
      %p153 = scmp.ne.s32.totalorder %s141, %s142
      %p154 = scmp.eq.s32.totalorder %s27, 1
      %p155 = por %p153, %p154
      %p157 = scmp.ne.s32.totalorder %s142, %s156
      %p158 = scmp.eq.s32.totalorder %s27, 0
      %p159 = por %p157, %p158
      %s161 = sadd.s32 %s160, 1
      %p164 = scmp.eq.s32.totalorder %s21, 1
      %p165 = scmp.ne.s32.totalorder %s160, %s162
      %p166 = scmp.eq.s32.totalorder %s21, 0
      %p167 = por %p165, %p166
      %p168 = scmp.ne.s32.totalorder %s160, %s162
      %p169 = scmp.eq.s32.totalorder %s26, 1
      %p170 = por %p168, %p169
      %p171 = scmp.ne.s32.totalorder %s162, %s163
      %p172 = scmp.eq.s32.totalorder %s26, 0
      %p173 = por %p171, %p172
      %p174 = scmp.ne.s32.totalorder %s162, %s163
      %p175 = scmp.eq.s32.totalorder %s27, 1
      %p176 = por %p174, %p175
      %p178 = scmp.ne.s32.totalorder %s163, %s177
      %p179 = scmp.eq.s32.totalorder %s27, 0
      %p180 = por %p178, %p179
      %s181 = ssub.s32 %s21, %s28
      %p182 = scmp.eq.s32.totalorder %s181, 0
      %s184 = sadd.s32 %s183, 1
      %s185 = scalar_select %p182, %s183, %s184
      %p188 = pneg %p182
      %p189 = scmp.eq.s32.totalorder %s21, 1
      %p190 = por %p188, %p189
      %p191 = scmp.ne.s32.totalorder %s183, %s186
      %p192 = scmp.eq.s32.totalorder %s21, 0
      %p193 = por %p191, %p192
      %p194 = scmp.ne.s32.totalorder %s183, %s186
      %p195 = scmp.eq.s32.totalorder %s26, 1
      %p196 = por %p194, %p195
      %p197 = scmp.ne.s32.totalorder %s186, %s187
      %p198 = scmp.eq.s32.totalorder %s26, 0
      %p199 = por %p197, %p198
      %p200 = scmp.ne.s32.totalorder %s186, %s187
      %p201 = scmp.eq.s32.totalorder %s27, 1
      %p202 = por %p200, %p201
      %p204 = scmp.ne.s32.totalorder %s187, %s203
      %p205 = scmp.eq.s32.totalorder %s27, 0
      %p206 = por %p204, %p205
      %p207 = scmp.le.s32.totalorder 1, %s21
      %p208 = scmp.lt.s32.totalorder %s21, 3
      %p209 = pnand %p207, %p208
      %p210 = pneg %p209
      // Predicated region
      $region9: #{tpu_custom_call.1} parent=5 // pred_check
        _
      $region10: #{tpu_custom_call.1} parent=5 // pred_check_branch
        %212 = sbr.rel (%p209) target = $region12
      $region11: #{tpu_custom_call.1} parent=5 // pred_region
        %s213 = ssub.s32 %s21, 1
        // Predicated region
        $region13: #{tpu_custom_call.1} parent=11 // pred_check
          %p214 = pneg %p68
        $region14: #{tpu_custom_call.1} parent=11 // pred_check_branch
          %216 = sbr.rel (%p214) target = $region16
        $region15: #{tpu_custom_call.1} parent=11 // pred_region
          %218 = vsyncadd [#allocation6], 0
          %s219 = sshll.u32 %s1, 4
          %s220 = int_to_ptr.hbm [resolvable:$true] %s219
          %s221 = sshll.u32 [#allocation5], 4
          %s222 = int_to_ptr.vmem [resolvable:$true] %s221
          %227 = dma.hbm_to_vmem [thread:$0]  %s220, 1024, %s222, [#allocation6], 64, 64, 4
        $region16: #{tpu_custom_call.1} parent=11 // pred_fallthru
          _
        // Predicated region
        $region17: #{tpu_custom_call.1} parent=11 // pred_check
          %p228 = pneg %p89
        $region18: #{tpu_custom_call.1} parent=11 // pred_check_branch
          %230 = sbr.rel (%p228) target = $region20
        $region19: #{tpu_custom_call.1} parent=11 // pred_region
          _
        $region20: #{tpu_custom_call.1} parent=11 // pred_fallthru
          _
        // Predicated region
        $region21: #{tpu_custom_call.1} parent=11 // pred_check
          %p231 = pneg %p110
        $region22: #{tpu_custom_call.1} parent=11 // pred_check_branch
          %233 = sbr.rel (%p231) target = $region24
        $region23: #{tpu_custom_call.1} parent=11 // pred_region
          %235 = vsyncadd [#allocation6], 0
          %s236 = sshll.u32 %s3, 4
          %s237 = int_to_ptr.hbm [resolvable:$true] %s236
          %s238 = sshll.u32 [#allocation7], 4
          %s239 = int_to_ptr.vmem [resolvable:$true] %s238
          %244 = dma.hbm_to_vmem [thread:$0]  %s237, 1024, %s239, [#allocation6], 64, 64, 4
        $region24: #{tpu_custom_call.1} parent=11 // pred_fallthru
          _
        // Predicated region
        $region25: #{tpu_custom_call.1} parent=11 // pred_check
          %p245 = pneg %p131
        $region26: #{tpu_custom_call.1} parent=11 // pred_check_branch
          %247 = sbr.rel (%p245) target = $region28
        $region27: #{tpu_custom_call.1} parent=11 // pred_region
          _
        $region28: #{tpu_custom_call.1} parent=11 // pred_fallthru
          _
        // Predicated region
        $region29: #{tpu_custom_call.1} parent=11 // pred_check
          %p248 = pneg %p152
        $region30: #{tpu_custom_call.1} parent=11 // pred_check_branch
          %250 = sbr.rel (%p248) target = $region32
        $region31: #{tpu_custom_call.1} parent=11 // pred_region
          %252 = vsyncadd [#allocation9], 0
          %s253 = sshll.u32 %s5, 4
          %s254 = int_to_ptr.hbm [resolvable:$true] %s253
          %s255 = sshll.u32 [#allocation8], 4
          %s256 = int_to_ptr.vmem [resolvable:$true] %s255
          %261 = dma.hbm_to_vmem [thread:$0]  %s254, 1024, %s256, [#allocation9], 64, 64, 4
        $region32: #{tpu_custom_call.1} parent=11 // pred_fallthru
          _
        // Predicated region
        $region33: #{tpu_custom_call.1} parent=11 // pred_check
          %p262 = pneg %p173
        $region34: #{tpu_custom_call.1} parent=11 // pred_check_branch
          %264 = sbr.rel (%p262) target = $region36
        $region35: #{tpu_custom_call.1} parent=11 // pred_region
          _
        $region36: #{tpu_custom_call.1} parent=11 // pred_fallthru
          _
      $region12: #{tpu_custom_call.1} parent=5 // pred_fallthru
        _
      %p265 = scmp.lt.s32.totalorder %s21, 2
      // Predicated region
      $region37: #{tpu_custom_call.1} parent=5 // pred_check
        %p266 = pneg %p265
      $region38: #{tpu_custom_call.1} parent=5 // pred_check_branch
        %268 = sbr.rel (%p266) target = $region40
      $region39: #{tpu_custom_call.1} parent=5 // pred_region
        // Predicated region
        $region41: #{tpu_custom_call.1} parent=39 // pred_check
          %p269 = pneg %p41
        $region42: #{tpu_custom_call.1} parent=39 // pred_check_branch
          %271 = sbr.rel (%p269) target = $region44
        $region43: #{tpu_custom_call.1} parent=39 // pred_region
          %s272 = sand.u32 %s31, 1
          %s273 = scalar_lea.sflag [#allocation3], %s272
          %s274 = sand.u32 %s31, 1
          %s275 = smul.addr %s274, 16
          %s276 = scalar_lea.vmem [#allocation2], %s275
          %s277 = smul.u32 4, %s21
          %279 = vsyncadd %s273, 0
          %s280 = smul.addr %s277, 4
          %s281 = scalar_lea.hbm %s0, %s280
          %s282 = sshll.u32 %s281, 4
          %s283 = int_to_ptr.hbm [resolvable:$true] %s282
          %s284 = sshll.u32 %s276, 4
          %s285 = int_to_ptr.vmem [resolvable:$true] %s284
          %290 = dma.hbm_to_vmem [thread:$0]  %s283, 256, %s285, %s273, 64, 64, 4
        $region44: #{tpu_custom_call.1} parent=39 // pred_fallthru
          _
      $region40: #{tpu_custom_call.1} parent=5 // pred_fallthru
        _
      %p291 = scmp.le.s32.totalorder 1, %s21
      %p292 = scmp.lt.s32.totalorder %s21, 3
      %p293 = pnand %p291, %p292
      %p294 = pneg %p293
      // Predicated region
      $region45: #{tpu_custom_call.1} parent=5 // pred_check
        _
      $region46: #{tpu_custom_call.1} parent=5 // pred_check_branch
        %296 = sbr.rel (%p293) target = $region48
      $region47: #{tpu_custom_call.1} parent=5 // pred_region
        %s297 = ssub.s32 %s21, 1
        %s298 = sand.u32 %s34, 1
        %s299 = scalar_lea.sflag [#allocation3], %s298
        %s300 = sand.u32 %s34, 1
        %s301 = smul.addr %s300, 16
        %s302 = scalar_lea.vmem [#allocation2], %s301
        // Predicated region
        $region49: #{tpu_custom_call.1} parent=47 // pred_check
          %p303 = pneg %p47
        $region50: #{tpu_custom_call.1} parent=47 // pred_check_branch
          %305 = sbr.rel (%p303) target = $region52
        $region51: #{tpu_custom_call.1} parent=47 // pred_region
          %307 = dma.done %s299, 256
        $region52: #{tpu_custom_call.1} parent=47 // pred_fallthru
          _
        // Predicated region
        $region53: #{tpu_custom_call.1} parent=47 // pred_check
          %p308 = pneg %p68
        $region54: #{tpu_custom_call.1} parent=47 // pred_check_branch
          %310 = sbr.rel (%p308) target = $region56
        $region55: #{tpu_custom_call.1} parent=47 // pred_region
          %312 = dma.done [#allocation6], 1024
        $region56: #{tpu_custom_call.1} parent=47 // pred_fallthru
          _
        // Predicated region
        $region57: #{tpu_custom_call.1} parent=47 // pred_check
          %p313 = pneg %p110
        $region58: #{tpu_custom_call.1} parent=47 // pred_check_branch
          %315 = sbr.rel (%p313) target = $region60
        $region59: #{tpu_custom_call.1} parent=47 // pred_region
          %317 = dma.done [#allocation6], 1024
        $region60: #{tpu_custom_call.1} parent=47 // pred_fallthru
          _
        // Predicated region
        $region61: #{tpu_custom_call.1} parent=47 // pred_check
          %p318 = pneg %p152
        $region62: #{tpu_custom_call.1} parent=47 // pred_check_branch
          %320 = sbr.rel (%p318) target = $region64
        $region63: #{tpu_custom_call.1} parent=47 // pred_region
          %322 = dma.done [#allocation9], 1024
        $region64: #{tpu_custom_call.1} parent=47 // pred_fallthru
          _
        %s323 = sand.u32 %s34, 1
        %s324 = scalar_lea.sflag [#allocation3], %s323
        %s325 = sand.u32 %s34, 1
        %s326 = smul.addr %s325, 16
        %s327 = scalar_lea.vmem [#allocation2], %s326
        %p328 = pneg %p47
        %p329 = pneg %p44
        %p330 = pneg %p68
        %p331 = pneg %p65
        %p332 = pneg %p89
        %p333 = pneg %p86
        %p334 = pneg %p110
        %p335 = pneg %p107
        %p336 = pneg %p131
        %p337 = pneg %p128
        %p338 = pneg %p152
        %p339 = pneg %p149
        %p340 = pneg %p173
        %p341 = pneg %p170
        %p342 = pneg %p199
        %p343 = pneg %p196
        %s344 = sand.u32 %s186, 1
        %s345 = scalar_lea.sflag [#allocation4], %s344
        %s346 = sand.u32 %s186, 1
        %s347 = smul.addr %s346, 32
        %s348 = scalar_lea.vmem [#allocation10], %s347
        %s349 = smul.u32 4, %s26
        %s350 = smul.u32 4, %s26
        %v351 = vld [vmem:[%s302] sm:$0xf]
        %v352 = vld [vmem:[%s302 + $0x4] sm:$0xf]
        %v353 = vld [vmem:[%s302 + $0x8] sm:$0xf]
        %v354 = vld [vmem:[%s302 + $0xc] sm:$0xf]
        %v355 = vld [vmem:[#allocation5] sm:$0xf]
        %v356 = vld [vmem:[#allocation5 + $0x4] sm:$0xf]
        %v357 = vld [vmem:[#allocation5 + $0x8] sm:$0xf]
        %v358 = vld [vmem:[#allocation5 + $0xc] sm:$0xf]
        %v359 = vld [vmem:[#allocation5 + $0x10] sm:$0xf]
        %v360 = vld [vmem:[#allocation5 + $0x14] sm:$0xf]
        %v361 = vld [vmem:[#allocation5 + $0x18] sm:$0xf]
        %v362 = vld [vmem:[#allocation5 + $0x1c] sm:$0xf]
        %v363 = vld [vmem:[#allocation5 + $0x20] sm:$0xf]
        %v364 = vld [vmem:[#allocation5 + $0x24] sm:$0xf]
        %v365 = vld [vmem:[#allocation5 + $0x28] sm:$0xf]
        %v366 = vld [vmem:[#allocation5 + $0x2c] sm:$0xf]
        %v367 = vld [vmem:[#allocation5 + $0x30] sm:$0xf]
        %v368 = vld [vmem:[#allocation5 + $0x34] sm:$0xf]
        %v369 = vld [vmem:[#allocation5 + $0x38] sm:$0xf]
        %v370 = vld [vmem:[#allocation5 + $0x3c] sm:$0xf]
        %v371 = vld [vmem:[%s2] sm:$0x1]
        %v373 = vperm.slane %v371, 0
        %v379 = vunpack.c.l.b16 %v351
        %v380 = vunpack.c.l.b16 %v352
        %v381 = vunpack.c.l.b16 %v353
        %v382 = vunpack.c.l.b16 %v354
        %v383 = vpack.c.b16 %v380, %v379
        %v384 = vpack.c.b16 %v382, %v381
        %v403 = vunpack.c.l.b16 %v355
        %v404 = vunpack.c.l.b16 %v356
        %v405 = vunpack.c.l.b16 %v357
        %v406 = vunpack.c.l.b16 %v358
        %v407 = vunpack.c.l.b16 %v359
        %v408 = vunpack.c.l.b16 %v360
        %v409 = vunpack.c.l.b16 %v361
        %v410 = vunpack.c.l.b16 %v362
        %v411 = vunpack.c.l.b16 %v363
        %v412 = vunpack.c.l.b16 %v364
        %v413 = vunpack.c.l.b16 %v365
        %v414 = vunpack.c.l.b16 %v366
        %v415 = vunpack.c.l.b16 %v367
        %v416 = vunpack.c.l.b16 %v368
        %v417 = vunpack.c.l.b16 %v369
        %v418 = vunpack.c.l.b16 %v370
        %v419 = vpack.c.b16 %v404, %v403
        %v420 = vpack.c.b16 %v406, %v405
        %v421 = vpack.c.b16 %v408, %v407
        %v422 = vpack.c.b16 %v410, %v409
        %v423 = vpack.c.b16 %v412, %v411
        %v424 = vpack.c.b16 %v414, %v413
        %v425 = vpack.c.b16 %v416, %v415
        %v426 = vpack.c.b16 %v418, %v417
        %435 = vmatpush.bf16.msra.mxu0 %v426
        %436 = vmatpush.bf16.msra.mxu0 %v425
        %437 = vmatpush.bf16.msra.mxu0 %v424
        %438 = vmatpush.bf16.msra.mxu0 %v423
        %439 = vmatpush.bf16.msra.mxu0 %v422
        %440 = vmatpush.bf16.msra.mxu0 %v421
        %441 = vmatpush.bf16.msra.mxu0 %v420
        %442 = vmatpush.bf16.msra.mxu0 %v419
        %443 = vmatmul.bf16.gmra.mxu0 %v383
        %v444 = vpop.f32.mrf.mxu0
        %v445 = vadd.f32 %v373, %v444
        %v446 = vpop.f32.mrf.mxu0
        %v447 = vadd.f32 %v373, %v446
        %448 = vmatmul.bf16.gmra.mxu0 %v384
        %v449 = vpop.f32.mrf.mxu0
        %v450 = vadd.f32 %v373, %v449
        %v451 = vpop.f32.mrf.mxu0
        %v452 = vadd.f32 %v373, %v451
        %453 = vdwg.mxu0
        %v454 = vmax.f32 %v445, 0.0
        %v455 = vmax.f32 %v447, 0.0
        %v456 = vmax.f32 %v450, 0.0
        %v457 = vmax.f32 %v452, 0.0
        %v458 = vpack.c.bf16 %v455, %v454
        %v459 = vpack.c.bf16 %v457, %v456
        %v460 = vld [vmem:[#allocation7] sm:$0xf]
        %v461 = vld [vmem:[#allocation7 + $0x4] sm:$0xf]
        %v462 = vld [vmem:[#allocation7 + $0x8] sm:$0xf]
        %v463 = vld [vmem:[#allocation7 + $0xc] sm:$0xf]
        %v464 = vld [vmem:[#allocation7 + $0x10] sm:$0xf]
        %v465 = vld [vmem:[#allocation7 + $0x14] sm:$0xf]
        %v466 = vld [vmem:[#allocation7 + $0x18] sm:$0xf]
        %v467 = vld [vmem:[#allocation7 + $0x1c] sm:$0xf]
        %v468 = vld [vmem:[#allocation7 + $0x20] sm:$0xf]
        %v469 = vld [vmem:[#allocation7 + $0x24] sm:$0xf]
        %v470 = vld [vmem:[#allocation7 + $0x28] sm:$0xf]
        %v471 = vld [vmem:[#allocation7 + $0x2c] sm:$0xf]
        %v472 = vld [vmem:[#allocation7 + $0x30] sm:$0xf]
        %v473 = vld [vmem:[#allocation7 + $0x34] sm:$0xf]
        %v474 = vld [vmem:[#allocation7 + $0x38] sm:$0xf]
        %v475 = vld [vmem:[#allocation7 + $0x3c] sm:$0xf]
        %v476 = vld [vmem:[%s4] sm:$0x1]
        %v478 = vperm.slane %v476, 0
        %v496 = vunpack.c.l.b16 %v460
        %v497 = vunpack.c.l.b16 %v461
        %v498 = vunpack.c.l.b16 %v462
        %v499 = vunpack.c.l.b16 %v463
        %v500 = vunpack.c.l.b16 %v464
        %v501 = vunpack.c.l.b16 %v465
        %v502 = vunpack.c.l.b16 %v466
        %v503 = vunpack.c.l.b16 %v467
        %v504 = vunpack.c.l.b16 %v468
        %v505 = vunpack.c.l.b16 %v469
        %v506 = vunpack.c.l.b16 %v470
        %v507 = vunpack.c.l.b16 %v471
        %v508 = vunpack.c.l.b16 %v472
        %v509 = vunpack.c.l.b16 %v473
        %v510 = vunpack.c.l.b16 %v474
        %v511 = vunpack.c.l.b16 %v475
        %v512 = vpack.c.b16 %v497, %v496
        %v513 = vpack.c.b16 %v499, %v498
        %v514 = vpack.c.b16 %v501, %v500
        %v515 = vpack.c.b16 %v503, %v502
        %v516 = vpack.c.b16 %v505, %v504
        %v517 = vpack.c.b16 %v507, %v506
        %v518 = vpack.c.b16 %v509, %v508
        %v519 = vpack.c.b16 %v511, %v510
        %528 = vmatpush.bf16.msra.mxu0 %v519
        %529 = vmatpush.bf16.msra.mxu0 %v518
        %530 = vmatpush.bf16.msra.mxu0 %v517
        %531 = vmatpush.bf16.msra.mxu0 %v516
        %532 = vmatpush.bf16.msra.mxu0 %v515
        %533 = vmatpush.bf16.msra.mxu0 %v514
        %534 = vmatpush.bf16.msra.mxu0 %v513
        %535 = vmatpush.bf16.msra.mxu0 %v512
        %536 = vmatmul.bf16.gmra.mxu0 %v458
        %v537 = vpop.f32.mrf.mxu0
        %v538 = vadd.f32 %v478, %v537
        %v539 = vpop.f32.mrf.mxu0
        %v540 = vadd.f32 %v478, %v539
        %541 = vmatmul.bf16.gmra.mxu0 %v459
        %v542 = vpop.f32.mrf.mxu0
        %v543 = vadd.f32 %v478, %v542
        %v544 = vpop.f32.mrf.mxu0
        %v545 = vadd.f32 %v478, %v544
        %546 = vdwg.mxu0
        %v547 = vmax.f32 %v538, 0.0
        %v548 = vmax.f32 %v540, 0.0
        %v549 = vmax.f32 %v543, 0.0
        %v550 = vmax.f32 %v545, 0.0
        %v551 = vpack.c.bf16 %v548, %v547
        %v552 = vpack.c.bf16 %v550, %v549
        %v553 = vld [vmem:[#allocation8] sm:$0xf]
        %v554 = vld [vmem:[#allocation8 + $0x4] sm:$0xf]
        %v555 = vld [vmem:[#allocation8 + $0x8] sm:$0xf]
        %v556 = vld [vmem:[#allocation8 + $0xc] sm:$0xf]
        %v557 = vld [vmem:[#allocation8 + $0x10] sm:$0xf]
        %v558 = vld [vmem:[#allocation8 + $0x14] sm:$0xf]
        %v559 = vld [vmem:[#allocation8 + $0x18] sm:$0xf]
        %v560 = vld [vmem:[#allocation8 + $0x1c] sm:$0xf]
        %v561 = vld [vmem:[#allocation8 + $0x20] sm:$0xf]
        %v562 = vld [vmem:[#allocation8 + $0x24] sm:$0xf]
        %v563 = vld [vmem:[#allocation8 + $0x28] sm:$0xf]
        %v564 = vld [vmem:[#allocation8 + $0x2c] sm:$0xf]
        %v565 = vld [vmem:[#allocation8 + $0x30] sm:$0xf]
        %v566 = vld [vmem:[#allocation8 + $0x34] sm:$0xf]
        %v567 = vld [vmem:[#allocation8 + $0x38] sm:$0xf]
        %v568 = vld [vmem:[#allocation8 + $0x3c] sm:$0xf]
        %v569 = vld [vmem:[%s6] sm:$0x1]
        %v571 = vperm.slane %v569, 0
        %v589 = vunpack.c.l.b16 %v553
        %v590 = vunpack.c.l.b16 %v554
        %v591 = vunpack.c.l.b16 %v555
        %v592 = vunpack.c.l.b16 %v556
        %v593 = vunpack.c.l.b16 %v557
        %v594 = vunpack.c.l.b16 %v558
        %v595 = vunpack.c.l.b16 %v559
        %v596 = vunpack.c.l.b16 %v560
        %v597 = vunpack.c.l.b16 %v561
        %v598 = vunpack.c.l.b16 %v562
        %v599 = vunpack.c.l.b16 %v563
        %v600 = vunpack.c.l.b16 %v564
        %v601 = vunpack.c.l.b16 %v565
        %v602 = vunpack.c.l.b16 %v566
        %v603 = vunpack.c.l.b16 %v567
        %v604 = vunpack.c.l.b16 %v568
        %v605 = vpack.c.b16 %v590, %v589
        %v606 = vpack.c.b16 %v592, %v591
        %v607 = vpack.c.b16 %v594, %v593
        %v608 = vpack.c.b16 %v596, %v595
        %v609 = vpack.c.b16 %v598, %v597
        %v610 = vpack.c.b16 %v600, %v599
        %v611 = vpack.c.b16 %v602, %v601
        %v612 = vpack.c.b16 %v604, %v603
        %621 = vmatpush.bf16.msra.mxu0 %v612
        %622 = vmatpush.bf16.msra.mxu0 %v611
        %623 = vmatpush.bf16.msra.mxu0 %v610
        %624 = vmatpush.bf16.msra.mxu0 %v609
        %625 = vmatpush.bf16.msra.mxu0 %v608
        %626 = vmatpush.bf16.msra.mxu0 %v607
        %627 = vmatpush.bf16.msra.mxu0 %v606
        %628 = vmatpush.bf16.msra.mxu0 %v605
        %629 = vmatmul.bf16.gmra.mxu0 %v551
        %v630 = vpop.f32.mrf.mxu0
        %v631 = vadd.f32 %v571, %v630
        %v632 = vpop.f32.mrf.mxu0
        %v633 = vadd.f32 %v571, %v632
        %634 = vmatmul.bf16.gmra.mxu0 %v552
        %v635 = vpop.f32.mrf.mxu0
        %v636 = vadd.f32 %v571, %v635
        %v637 = vpop.f32.mrf.mxu0
        %v638 = vadd.f32 %v571, %v637
        %639 = vdwg.mxu0
        %v640 = vtanh.pop %v631
        %v641 = vtanh.pop %v633
        %v642 = vtanh.pop %v636
        %v643 = vtanh.pop %v638
        %644 = vst [vmem:[%s348] sm:$0xff] %v640
        %645 = vst [vmem:[%s348 + $0x8] sm:$0xff] %v641
        %646 = vst [vmem:[%s348 + $0x10] sm:$0xff] %v642
        %647 = vst [vmem:[%s348 + $0x18] sm:$0xff] %v643
        %s648 = sand.u32 %s186, 1
        %s649 = scalar_lea.sflag [#allocation4], %s648
        %s650 = sand.u32 %s186, 1
        %s651 = smul.addr %s650, 32
        %s652 = scalar_lea.vmem [#allocation10], %s651
        // Predicated region
        $region65: #{tpu_custom_call.1} parent=47 // pred_check
          %p653 = pneg %p196
        $region66: #{tpu_custom_call.1} parent=47 // pred_check_branch
          %655 = sbr.rel (%p653) target = $region68
        $region67: #{tpu_custom_call.1} parent=47 // pred_region
          %s656 = smul.u32 4, %s26
          %658 = vsyncadd %s649, 0
          %s659 = smul.addr %s656, 8
          %s660 = scalar_lea.hbm %s7, %s659
          %s661 = sshll.u32 %s652, 4
          %s662 = int_to_ptr.vmem [resolvable:$true] %s661
          %s663 = sshll.u32 %s660, 4
          %s664 = int_to_ptr.hbm [resolvable:$true] %s663
          %669 = dma.vmem_to_hbm [thread:$0]  %s662, 512, %s664, %s649, 128, 128, 8
        $region68: #{tpu_custom_call.1} parent=47 // pred_fallthru
          _
      $region48: #{tpu_custom_call.1} parent=5 // pred_fallthru
        _
      %p670 = scmp.le.s32.totalorder 2, %s21
      // Predicated region
      $region69: #{tpu_custom_call.1} parent=5 // pred_check
        %p671 = pneg %p670
      $region70: #{tpu_custom_call.1} parent=5 // pred_check_branch
        %673 = sbr.rel (%p671) target = $region72
      $region71: #{tpu_custom_call.1} parent=5 // pred_region
        %s674 = ssub.s32 %s21, 2
        // Predicated region
        $region73: #{tpu_custom_call.1} parent=71 // pred_check
          %p675 = pneg %p202
        $region74: #{tpu_custom_call.1} parent=71 // pred_check_branch
          %677 = sbr.rel (%p675) target = $region76
        $region75: #{tpu_custom_call.1} parent=71 // pred_region
          %s678 = sand.u32 %s187, 1
          %s679 = scalar_lea.sflag [#allocation4], %s678
          %s680 = sand.u32 %s187, 1
          %s681 = smul.addr %s680, 32
          %s682 = scalar_lea.vmem [#allocation10], %s681
          %684 = dma.done %s679, 512
        $region76: #{tpu_custom_call.1} parent=71 // pred_fallthru
          _
      $region72: #{tpu_custom_call.1} parent=5 // pred_fallthru
        _
    $region6: #{tpu_custom_call.1} parent=1 // loop_footer
      %s25 = sadd.s32 1, %s21
    $region7: #{tpu_custom_call.1} parent=1 // loop_footer_branch
      %20 = sbr.rel target = $region3
    $region8: #{tpu_custom_call.1} parent=1 // loop_exit
      _
    %685 = vsyncpa [#allocation3], 1
    %s686 = scalar_lea.sflag [#allocation3], 1
    %687 = vsyncpa %s686, 1
    %688 = vsyncpa [#allocation6], 1
    %689 = vsyncpa [#allocation9], 1
    %690 = vsyncpa [#allocation4], 1
    %s691 = scalar_lea.sflag [#allocation4], 1
    %692 = vsyncpa %s691, 1

</llo_original>
